<compile_context>
chip_gen: v7x
topology: tpu7x:2x2x1
jax: 0.10.0
libtpu: 0.0.40
codegen_flags: <defaults>
</compile_context>

<pallas_src>
import jax
import jax.numpy as jnp
from jax.experimental import pallas as pl
from jax.experimental.pallas import tpu as pltpu


def loss_for_localization(objects, scores, locs, label, gt,
                          obj_coor, no_obj_confi, img_class_weight,
                          block_batch=128):
    B, H, W = objects.shape
    HW = H * W
    C = scores.shape[-1]

    # Batch tile: big enough to amortize per-step overhead, small enough that
    # double-buffered inputs stay in low-MB VMEM (40*HW bytes per element).
    Bt = B if B <= block_batch else block_batch
    if Bt != B and Bt % 8 != 0:           # keep sublane-dim constraint happy
        Bt = max(8, (Bt // 8) * 8)
    nsteps = (B + Bt - 1) // Bt
    ragged = (B % Bt) != 0

    # Layout plumbing in the wrapper (cheap XLA slices / free reshapes):
    # batch -> sublane axis, H*W -> dense lane axis, dead locs channel dropped.
    obj2 = objects.reshape(B, HW)
    gobj2 = gt[:, 0, :, :].reshape(B, HW)
    gtc3 = gt[:, 1:5, :, :].reshape(B, 4, HW)
    locs3 = locs[:, 0:4, :, :].reshape(B, 4, HW)
    lab2 = label.astype(jnp.int32).reshape(B, 1)
    weights = jnp.array([no_obj_confi, obj_coor, img_class_weight],
                        dtype=jnp.float32)

    def kernel(obj_ref, gobj_ref, locs_ref, gtc_ref, scores_ref, lab_ref,
               w_ref, out_ref):
        step = pl.program_id(0)
        no_obj_w = w_ref[0]     # no_obj_confi
        coor_w = w_ref[1]       # obj_coor
        cls_w = w_ref[2]        # img_class_weight

        obj = obj_ref[...].astype(jnp.float32)    # (Bt, HW) predicted objectness
        g = gobj_ref[...].astype(jnp.float32)     # (Bt, HW) gt objectness

        # NOTE: exact 0.0/1.0 comparisons match the PyTorch reference; gt must
        # be provided in f32 (lossless).
        mask0 = g == 0.0
        mask1 = g == 1.0
        if ragged:
            # Mask rows of the (unspecified) padded last block.
            row = jax.lax.broadcasted_iota(jnp.int32, obj.shape, 0)
            valid = (step * Bt + row) < B
            mask0 = jnp.logical_and(mask0, valid)
            mask1 = jnp.logical_and(mask1, valid)

        # Fused BCE: a single log per cell, no-object weight folded into the
        # per-cell weight.  gt==1 -> -log(p);  gt==0 -> -no_obj_w*log(1-p).
        t = jnp.where(mask1, obj, jnp.where(mask0, 1.0 - obj, 1.0))
        log_t = jnp.maximum(jnp.log(t), -100.0)   # PyTorch BCE log clamp
        wgt = mask1.astype(jnp.float32) + no_obj_w * mask0.astype(jnp.float32)
        confi_loss = -jnp.sum(log_t * wgt)

        # Coordinate regression on gt==1 cells: one pass over the 4-channel slab.
        d = (locs_ref[...].astype(jnp.float32)
             - gtc_ref[...].astype(jnp.float32))          # (Bt, 4, HW)
        sq = jnp.sum(d * d, axis=1)                        # (Bt, HW)
        coor_loss = jnp.sum(jnp.where(mask1, sq, 0.0))     # where avoids NaN*0

        out_ref[...] = jnp.full((1, 1), confi_loss + coor_w * coor_loss,
                                dtype=jnp.float32)

        # Classification cross-entropy: computed once, on the full resident
        # (B, C) scores block, and folded into the step-0 partial sum.
        @pl.when(step == 0)
        def _():
            s = scores_ref[...].astype(jnp.float32)        # (B, C)
            lab = lab_ref[...]                              # (B, 1) int32
            m = jnp.max(s, axis=-1, keepdims=True)
            lse = m + jnp.log(jnp.sum(jnp.exp(s - m), axis=-1, keepdims=True))
            cls_ids = jax.lax.broadcasted_iota(jnp.int32, s.shape, 1)
            true_logit = jnp.sum(jnp.where(cls_ids == lab, s, 0.0),
                                 axis=-1, keepdims=True)
            ce_sum = jnp.sum(lse - true_logit)
            out_ref[...] = out_ref[...] + cls_w * ce_sum

    elem_bytes = jnp.dtype(objects.dtype).itemsize
    cost = pl.CostEstimate(
        flops=int(25 * B * HW + 10 * B * C),
        transcendentals=int(B * HW + 2 * B * C),
        bytes_accessed=int(elem_bytes * B * HW * 10 + 4 * B * C + 4 * B
                           + 4 * nsteps + 12),
    )

    partials = pl.pallas_call(
        kernel,
        out_shape=jax.ShapeDtypeStruct((nsteps, 1), jnp.float32),
        grid=(nsteps,),
        in_specs=[
            pl.BlockSpec((Bt, HW), lambda i: (i, 0)),        # objects
            pl.BlockSpec((Bt, HW), lambda i: (i, 0)),        # gt objectness
            pl.BlockSpec((Bt, 4, HW), lambda i: (i, 0, 0)),  # locs coords (4 ch)
            pl.BlockSpec((Bt, 4, HW), lambda i: (i, 0, 0)),  # gt coords (4 ch)
            pl.BlockSpec((B, C), lambda i: (0, 0)),          # scores (resident)
            pl.BlockSpec((B, 1), lambda i: (0, 0)),          # labels (resident)
            pl.BlockSpec(memory_space=pltpu.MemorySpace.SMEM),  # loss weights (3,)
        ],
        out_specs=pl.BlockSpec((1, 1), lambda i: (i, 0)),    # per-step partials
        compiler_params=pltpu.CompilerParams(
            dimension_semantics=("parallel",)),              # megacore-shardable
        cost_estimate=cost,
    )(obj2, gobj2, locs3, gtc3, scores, lab2, weights)

    # Final tiny reduction over <= cdiv(B, Bt) partials in the wrapper;
    # divide by the true batch size B (not num_programs).
    return jnp.sum(partials) / B


def _reference_loss(objects, scores, locs, label, gt,
                    obj_coor, no_obj_confi, img_class_weight):
    """Pure-JAX reference with identical semantics, for validation."""
    B = objects.shape[0]
    g = gt[:, 0]
    mask0 = (g == 0.0)
    mask1 = (g == 1.0)
    log_p = jnp.maximum(jnp.log(objects), -100.0)
    log_1mp = jnp.maximum(jnp.log(1.0 - objects), -100.0)
    no_obj_loss = jnp.sum(jnp.where(mask0, -log_1mp, 0.0))
    obj_conf_loss = jnp.sum(jnp.where(mask1, -log_p, 0.0))
    diff = locs[:, 0:4] - gt[:, 1:5]
    coor_loss = jnp.sum(jnp.where(mask1, jnp.sum(diff * diff, axis=1), 0.0))
    lse = jax.scipy.special.logsumexp(scores, axis=-1)
    true_logit = jnp.take_along_axis(
        scores, label[:, None].astype(jnp.int32), axis=-1)[:, 0]
    ce = jnp.mean(lse - true_logit)
    return (img_class_weight * ce
            + (no_obj_confi * no_obj_loss + obj_conf_loss
               + obj_coor * coor_loss) / B)


if __name__ == "__main__":
    key = jax.random.PRNGKey(0)
    B, H, W, C = 2, 16, 16, 4

    k1, k2, k3, k4, k5, k6 = jax.random.split(key, 6)
    objects = jax.nn.sigmoid(jax.random.normal(k1, (B, H, W), dtype=jnp.float32))
    scores = jax.random.normal(k2, (B, C), dtype=jnp.float32)
    locs = jax.random.normal(k3, (B, 5, H, W), dtype=jnp.float32)
    label = jax.random.randint(k4, (B,), 0, C)
    gt_obj = jax.random.bernoulli(k5, 0.3, (B, 1, H, W)).astype(jnp.float32)
    gt_coords = jax.random.normal(k6, (B, 4, H, W), dtype=jnp.float32)
    gt = jnp.concatenate([gt_obj, gt_coords], axis=1)          # (B, 5, H, W)

    obj_coor = 5.0
    no_obj_confi = 0.5
    img_class_weight = 1.0

    out = loss_for_localization(objects, scores, locs, label, gt,
                                obj_coor, no_obj_confi, img_class_weight)
    out = jax.block_until_ready(out)

    ref = _reference_loss(objects, scores, locs, label, gt,
                          obj_coor, no_obj_confi, img_class_weight)
    ref = jax.block_until_ready(ref)

    assert jnp.allclose(out, ref, rtol=1e-5, atol=1e-5), (out, ref)
    print("KERNEL_OK")
</pallas_src>

<mosaic_0001>
module attributes {stable_mosaic.version = 11 : i64} {
  func.func @kernel(%arg0: i32, %arg1: memref<2x256xf32, #tpu.memory_space<vmem>>, %arg2: memref<2x256xf32, #tpu.memory_space<vmem>>, %arg3: memref<2x4x256xf32, #tpu.memory_space<vmem>>, %arg4: memref<2x4x256xf32, #tpu.memory_space<vmem>>, %arg5: memref<2x4xf32, #tpu.memory_space<vmem>>, %arg6: memref<2x1xi32, #tpu.memory_space<vmem>>, %arg7: memref<3xf32, #tpu.memory_space<smem>>, %arg8: memref<1x1xf32, #tpu.memory_space<vmem>>) attributes {dimension_semantics = [#tpu.dimension_semantics<parallel>], iteration_bounds = array<i64: 1>, scalar_prefetch = 0 : i64, scratch_operands = 0 : i64, tpu.core_type = #tpu.core_type<tc>, window_params = [{transform_indices = @transform_0, window_bounds = array<i64: 2, 256>}, {transform_indices = @transform_1, window_bounds = array<i64: 2, 256>}, {transform_indices = @transform_2, window_bounds = array<i64: 2, 4, 256>}, {transform_indices = @transform_3, window_bounds = array<i64: 2, 4, 256>}, {pipeline_mode = #tpu.pipeline_mode<synchronous>, transform_indices = @transform_4, window_bounds = array<i64: 2, 4>}, {pipeline_mode = #tpu.pipeline_mode<synchronous>, transform_indices = @transform_5, window_bounds = array<i64: 2, 1>}, {transform_indices = @transform_6, window_bounds = array<i64: 3>}, {transform_indices = @transform_7, window_bounds = array<i64: 1, 1>}]} {
    %c0 = arith.constant 0 : index
    %0 = memref.load %arg7[%c0] : memref<3xf32, #tpu.memory_space<smem>>
    %c1 = arith.constant 1 : index
    %1 = memref.load %arg7[%c1] : memref<3xf32, #tpu.memory_space<smem>>
    %c2 = arith.constant 2 : index
    %2 = memref.load %arg7[%c2] : memref<3xf32, #tpu.memory_space<smem>>
    %c0_0 = arith.constant 0 : index
    %c0_1 = arith.constant 0 : index
    %3 = vector.load %arg1[%c0_0, %c0_1] : memref<2x256xf32, #tpu.memory_space<vmem>>, vector<2x256xf32>
    %c0_2 = arith.constant 0 : index
    %c0_3 = arith.constant 0 : index
    %4 = vector.load %arg2[%c0_2, %c0_3] : memref<2x256xf32, #tpu.memory_space<vmem>>, vector<2x256xf32>
    %cst = arith.constant 0.000000e+00 : f32
    %5 = vector.broadcast %cst : f32 to vector<2x256xf32>
    %6 = arith.cmpf oeq, %4, %5 : vector<2x256xf32>
    %cst_4 = arith.constant 1.000000e+00 : f32
    %7 = vector.broadcast %cst_4 : f32 to vector<2x256xf32>
    %8 = arith.cmpf oeq, %4, %7 : vector<2x256xf32>
    %cst_5 = arith.constant 1.000000e+00 : f32
    %9 = vector.broadcast %cst_5 : f32 to vector<2x256xf32>
    %10 = arith.subf %9, %3 : vector<2x256xf32>
    %cst_6 = arith.constant 1.000000e+00 : f32
    %11 = vector.broadcast %cst_6 : f32 to vector<2x256xf32>
    %12 = arith.select %6, %10, %11 : vector<2x256xi1>, vector<2x256xf32>
    %13 = arith.select %8, %3, %12 : vector<2x256xi1>, vector<2x256xf32>
    %14 = math.log %13 : vector<2x256xf32>
    %cst_7 = arith.constant -1.000000e+02 : f32
    %15 = vector.broadcast %cst_7 : f32 to vector<2x256xf32>
    %16 = arith.maximumf %14, %15 : vector<2x256xf32>
    %17 = arith.extui %8 : vector<2x256xi1> to vector<2x256xi32>
    %18 = arith.sitofp %17 : vector<2x256xi32> to vector<2x256xf32>
    %19 = arith.extui %6 : vector<2x256xi1> to vector<2x256xi32>
    %20 = arith.sitofp %19 : vector<2x256xi32> to vector<2x256xf32>
    %21 = vector.broadcast %0 : f32 to vector<2x256xf32>
    %22 = arith.mulf %21, %20 : vector<2x256xf32>
    %23 = arith.addf %18, %22 : vector<2x256xf32>
    %24 = arith.mulf %16, %23 : vector<2x256xf32>
    %25 = vector.shape_cast %24 : vector<2x256xf32> to vector<1x2x256xf32>
    %cst_8 = arith.constant dense<0.000000e+00> : vector<1xf32>
    %26 = vector.multi_reduction <add>, %25, %cst_8 [1, 2] : vector<1x2x256xf32> to vector<1xf32>
    %27 = vector.shape_cast %26 : vector<1xf32> to vector<1x1x1xf32>
    %28 = vector.extract %27[0, 0, 0] : f32 from vector<1x1x1xf32>
    %cst_9 = arith.constant 0.000000e+00 : f32
    %29 = arith.subf %cst_9, %28 : f32
    %c0_10 = arith.constant 0 : index
    %c0_11 = arith.constant 0 : index
    %c0_12 = arith.constant 0 : index
    %30 = vector.load %arg3[%c0_10, %c0_11, %c0_12] : memref<2x4x256xf32, #tpu.memory_space<vmem>>, vector<2x4x256xf32>
    %c0_13 = arith.constant 0 : index
    %c0_14 = arith.constant 0 : index
    %c0_15 = arith.constant 0 : index
    %31 = vector.load %arg4[%c0_13, %c0_14, %c0_15] : memref<2x4x256xf32, #tpu.memory_space<vmem>>, vector<2x4x256xf32>
    %32 = arith.subf %30, %31 : vector<2x4x256xf32>
    %33 = arith.mulf %32, %32 : vector<2x4x256xf32>
    %cst_16 = arith.constant dense<0.000000e+00> : vector<2x256xf32>
    %34 = vector.multi_reduction <add>, %33, %cst_16 [1] : vector<2x4x256xf32> to vector<2x256xf32>
    %cst_17 = arith.constant 0.000000e+00 : f32
    %35 = vector.broadcast %cst_17 : f32 to vector<2x256xf32>
    %36 = arith.select %8, %34, %35 : vector<2x256xi1>, vector<2x256xf32>
    %37 = vector.shape_cast %36 : vector<2x256xf32> to vector<1x2x256xf32>
    %cst_18 = arith.constant dense<0.000000e+00> : vector<1xf32>
    %38 = vector.multi_reduction <add>, %37, %cst_18 [1, 2] : vector<1x2x256xf32> to vector<1xf32>
    %39 = vector.shape_cast %38 : vector<1xf32> to vector<1x1x1xf32>
    %40 = vector.extract %39[0, 0, 0] : f32 from vector<1x1x1xf32>
    %41 = arith.mulf %1, %40 : f32
    %42 = arith.addf %29, %41 : f32
    %43 = vector.broadcast %42 : f32 to vector<1x1xf32>
    %c0_19 = arith.constant 0 : index
    %c0_20 = arith.constant 0 : index
    %44 = vector.load %arg8[%c0_19, %c0_20] : memref<1x1xf32, #tpu.memory_space<vmem>>, vector<1x1xf32>
    tpu.vector_store %arg8[%c0_19, %c0_20], %43 {strides = array<i32>} : memref<1x1xf32, #tpu.memory_space<vmem>>, vector<1x1xf32>,
    %c0_i32 = arith.constant 0 : i32
    %45 = arith.cmpi eq, %arg0, %c0_i32 : i32
    %46 = arith.extui %45 : i1 to i32
    %c0_i32_21 = arith.constant 0 : i32
    %47 = arith.cmpi ne, %46, %c0_i32_21 : i32
    scf.if %47 {
      %c0_22 = arith.constant 0 : index
      %c0_23 = arith.constant 0 : index
      %48 = vector.load %arg5[%c0_22, %c0_23] : memref<2x4xf32, #tpu.memory_space<vmem>>, vector<2x4xf32>
      %c0_24 = arith.constant 0 : index
      %c0_25 = arith.constant 0 : index
      %49 = vector.load %arg6[%c0_24, %c0_25] : memref<2x1xi32, #tpu.memory_space<vmem>>, vector<2x1xi32>
      %cst_26 = arith.constant dense<0xFF800000> : vector<2xf32>
      %50 = vector.multi_reduction <maximumf>, %48, %cst_26 [1] : vector<2x4xf32> to vector<2xf32>
      %51 = vector.shape_cast %50 : vector<2xf32> to vector<2x1xf32>
      %52 = vector.broadcast %51 : vector<2x1xf32> to vector<2x4xf32>
      %53 = arith.subf %48, %52 : vector<2x4xf32>
      %54 = math.exp %53 : vector<2x4xf32>
      %cst_27 = arith.constant dense<0.000000e+00> : vector<2xf32>
      %55 = vector.multi_reduction <add>, %54, %cst_27 [1] : vector<2x4xf32> to vector<2xf32>
      %56 = vector.shape_cast %55 : vector<2xf32> to vector<2x1xf32>
      %57 = math.log %56 : vector<2x1xf32>
      %58 = arith.addf %51, %57 : vector<2x1xf32>
      %59 = tpu.iota {dimensions = array<i32: 1>} : vector<2x4xi32>
      %60 = vector.broadcast %49 : vector<2x1xi32> to vector<2x4xi32>
      %61 = arith.cmpi eq, %59, %60 : vector<2x4xi32>
      %cst_28 = arith.constant 0.000000e+00 : f32
      %62 = vector.broadcast %cst_28 : f32 to vector<2x4xf32>
      %63 = arith.select %61, %48, %62 : vector<2x4xi1>, vector<2x4xf32>
      %cst_29 = arith.constant dense<0.000000e+00> : vector<2xf32>
      %64 = vector.multi_reduction <add>, %63, %cst_29 [1] : vector<2x4xf32> to vector<2xf32>
      %65 = vector.shape_cast %64 : vector<2xf32> to vector<2x1xf32>
      %66 = arith.subf %58, %65 : vector<2x1xf32>
      %67 = vector.shape_cast %66 : vector<2x1xf32> to vector<1x2x1xf32>
      %cst_30 = arith.constant dense<0.000000e+00> : vector<1xf32>
      %68 = vector.multi_reduction <add>, %67, %cst_30 [1, 2] : vector<1x2x1xf32> to vector<1xf32>
      %69 = vector.shape_cast %68 : vector<1xf32> to vector<1x1x1xf32>
      %70 = vector.extract %69[0, 0, 0] : f32 from vector<1x1x1xf32>
      %c0_31 = arith.constant 0 : index
      %c0_32 = arith.constant 0 : index
      %71 = vector.load %arg8[%c0_31, %c0_32] : memref<1x1xf32, #tpu.memory_space<vmem>>, vector<1x1xf32>
      %72 = arith.mulf %2, %70 : f32
      %73 = vector.broadcast %72 : f32 to vector<1x1xf32>
      %74 = arith.addf %71, %73 : vector<1x1xf32>
      %c0_33 = arith.constant 0 : index
      %c0_34 = arith.constant 0 : index
      %75 = vector.load %arg8[%c0_33, %c0_34] : memref<1x1xf32, #tpu.memory_space<vmem>>, vector<1x1xf32>
      tpu.vector_store %arg8[%c0_33, %c0_34], %74 {strides = array<i32>} : memref<1x1xf32, #tpu.memory_space<vmem>>, vector<1x1xf32>,
    } else {
    }
    return
  }
  func.func @transform_0(%arg0: i32) -> (i32, i32) {
    %c0_i32 = arith.constant 0 : i32
    %c0_i32_0 = arith.constant 0 : i32
    return %arg0, %c0_i32 : i32, i32
  }
  func.func @transform_1(%arg0: i32) -> (i32, i32) {
    %c0_i32 = arith.constant 0 : i32
    %c0_i32_0 = arith.constant 0 : i32
    return %arg0, %c0_i32 : i32, i32
  }
  func.func @transform_2(%arg0: i32) -> (i32, i32, i32) {
    %c0_i32 = arith.constant 0 : i32
    %c0_i32_0 = arith.constant 0 : i32
    %c0_i32_1 = arith.constant 0 : i32
    return %arg0, %c0_i32, %c0_i32_0 : i32, i32, i32
  }
  func.func @transform_3(%arg0: i32) -> (i32, i32, i32) {
    %c0_i32 = arith.constant 0 : i32
    %c0_i32_0 = arith.constant 0 : i32
    %c0_i32_1 = arith.constant 0 : i32
    return %arg0, %c0_i32, %c0_i32_0 : i32, i32, i32
  }
  func.func @transform_4(%arg0: i32) -> (i32, i32) {
    %c0_i32 = arith.constant 0 : i32
    %c0_i32_0 = arith.constant 0 : i32
    %c0_i32_1 = arith.constant 0 : i32
    return %c0_i32, %c0_i32_0 : i32, i32
  }
  func.func @transform_5(%arg0: i32) -> (i32, i32) {
    %c0_i32 = arith.constant 0 : i32
    %c0_i32_0 = arith.constant 0 : i32
    %c0_i32_1 = arith.constant 0 : i32
    return %c0_i32, %c0_i32_0 : i32, i32
  }
  func.func @transform_6(%arg0: i32) -> i32 {
    %c0_i32 = arith.constant 0 : i32
    %c0_i32_0 = arith.constant 0 : i32
    return %c0_i32 : i32
  }
  func.func @transform_7(%arg0: i32) -> (i32, i32) {
    %c0_i32 = arith.constant 0 : i32
    %c0_i32_0 = arith.constant 0 : i32
    return %arg0, %c0_i32 : i32, i32
  }
}

</mosaic_0001>

<llo_original>
// kernel: tpu_custom_call.1
$region0: #{tpu_custom_call.1}
  #allocation0 [shape = 'u32[]', space=smem, size = 0x4, offset = 0x4, fixed_abs, tag = 'smem constant byte address 0x4 - core index']
  #allocation1 [shape = 'u32[144,128]{1,0:T(1,128)}', space=vmem, size = 0x12000, scoped, tag = 'internal scratch']
  %s0 = inlined_call_operand.hbm [shape: f32[2,256], index: 0, kind: input, shape index: {}]
  %s1 = inlined_call_operand.vmem [shape: f32[2,256], index: 1, kind: input, shape index: {}]
  %s2 = inlined_call_operand.hbm [shape: f32[2,4,256], index: 2, kind: input, shape index: {}]
  %s3 = inlined_call_operand.hbm [shape: f32[2,4,256], index: 3, kind: input, shape index: {}]
  %s4 = inlined_call_operand.vmem [shape: f32[2,4], index: 4, kind: input, shape index: {}]
  %s5 = inlined_call_operand.vmem [shape: s32[2,1], index: 5, kind: input, shape index: {}]
  %s6 = inlined_call_operand.vmem [shape: f32[3], index: 6, kind: input, shape index: {}]
  %s7 = inlined_call_operand.hbm [shape: f32[1,1], index: 7, kind: output, shape index: {}]
  %s8 = sld [smem:[#allocation0]]
  $region58: #{tpu_custom_call.1} parent=0
    _
  %s10 = ssub.s32 1, %s8
  %s11 = scalar_select 0, %s10, %s8
  $region1: #{tpu_custom_call.1} parent=0
    #allocation2 [shape = 'u8[2048]{0}', space=vmem, size = 0x800, scoped, tag = 'input window, operand 0, single buffered']
    #allocation3 [shape = 's32[1]{0}', space=sflag, size = 0x4, scoped, tag = 'scoped memory for tpu_custom_call.1']
    #allocation4 [shape = 's32[1]{0}', space=sflag, size = 0x4, scoped, tag = 'scoped memory for tpu_custom_call.1']
    #allocation5 [shape = 's32[1]{0}', space=sflag, size = 0x4, scoped, tag = 'scoped memory for tpu_custom_call.1']
    #allocation6 [shape = 'u8[8192]{0}', space=vmem, size = 0x2000, scoped, tag = 'input window, operand 2, single buffered']
    #allocation7 [shape = 's32[1]{0}', space=sflag, size = 0x4, scoped, tag = 'scoped memory for tpu_custom_call.1']
    #allocation8 [shape = 'u8[8192]{0}', space=vmem, size = 0x2000, scoped, tag = 'input window, operand 3, single buffered']
    #allocation9 [shape = 'u8[512]{0}', space=smem, size = 0x200, scoped, tag = 'input window, operand 6, single buffered']
    #allocation10 [shape = 'u8[512]{0}', space=vmem, size = 0x400, scoped, tag = 'output window, operand 0, single buffered']
    %12 = vsyncpa [#allocation3], 0
    %13 = vsyncpa [#allocation7], 0
    %14 = vsyncpa [#allocation5], 0
    %15 = vsyncpa [#allocation4], 0
    // Predicated region
    $region2: #{tpu_custom_call.1} parent=1 // pred_check
      _
    $region3: #{tpu_custom_call.1} parent=1 // pred_check_branch
      %17 = sbr.rel (0) target = $region5
    $region4: #{tpu_custom_call.1} parent=1 // pred_region
      %s19 = ssub.s32 64, 64
      %20 = vsyncadd [#allocation3], %s19
      %s22 = sshll.u32 [#allocation2], 4
      %s23 = int_to_ptr.vmem [resolvable:$true] %s22
      %25 = dma.hbm_to_vmem [thread:$0]  %s0, 64, %s23, [#allocation3]
    $region5: #{tpu_custom_call.1} parent=1 // pred_fallthru
      _
    // Predicated region
    $region6: #{tpu_custom_call.1} parent=1 // pred_check
      _
    $region7: #{tpu_custom_call.1} parent=1 // pred_check_branch
      %27 = sbr.rel (0) target = $region9
    $region8: #{tpu_custom_call.1} parent=1 // pred_region
      _
    $region9: #{tpu_custom_call.1} parent=1 // pred_fallthru
      _
    // Predicated region
    $region10: #{tpu_custom_call.1} parent=1 // pred_check
      _
    $region11: #{tpu_custom_call.1} parent=1 // pred_check_branch
      %29 = sbr.rel (0) target = $region13
    $region12: #{tpu_custom_call.1} parent=1 // pred_region
      %s31 = ssub.s32 256, 256
      %32 = vsyncadd [#allocation7], %s31
      %s33 = sshll.u32 [#allocation6], 4
      %s34 = int_to_ptr.vmem [resolvable:$true] %s33
      %39 = dma.hbm_to_vmem [thread:$0]  %s2, 256, %s34, [#allocation7], 128, 128, 8
    $region13: #{tpu_custom_call.1} parent=1 // pred_fallthru
      _
    // Predicated region
    $region14: #{tpu_custom_call.1} parent=1 // pred_check
      _
    $region15: #{tpu_custom_call.1} parent=1 // pred_check_branch
      %41 = sbr.rel (0) target = $region17
    $region16: #{tpu_custom_call.1} parent=1 // pred_region
      %s43 = ssub.s32 256, 256
      %44 = vsyncadd [#allocation7], %s43
      %s45 = sshll.u32 [#allocation8], 4
      %s46 = int_to_ptr.vmem [resolvable:$true] %s45
      %51 = dma.hbm_to_vmem [thread:$0]  %s3, 256, %s46, [#allocation7], 128, 128, 8
    $region17: #{tpu_custom_call.1} parent=1 // pred_fallthru
      _
    // Predicated region
    $region18: #{tpu_custom_call.1} parent=1 // pred_check
      _
    $region19: #{tpu_custom_call.1} parent=1 // pred_check_branch
      %53 = sbr.rel (0) target = $region21
    $region20: #{tpu_custom_call.1} parent=1 // pred_region
      _
    $region21: #{tpu_custom_call.1} parent=1 // pred_fallthru
      _
    // Predicated region
    $region22: #{tpu_custom_call.1} parent=1 // pred_check
      _
    $region23: #{tpu_custom_call.1} parent=1 // pred_check_branch
      %55 = sbr.rel (0) target = $region25
    $region24: #{tpu_custom_call.1} parent=1 // pred_region
      _
    $region25: #{tpu_custom_call.1} parent=1 // pred_fallthru
      _
    // Predicated region
    $region26: #{tpu_custom_call.1} parent=1 // pred_check
      _
    $region27: #{tpu_custom_call.1} parent=1 // pred_check_branch
      %57 = sbr.rel (0) target = $region29
    $region28: #{tpu_custom_call.1} parent=1 // pred_region
      %s59 = ssub.s32 16, 16
      %60 = vsyncadd [#allocation5], %s59
      %s62 = sshll.u32 %s6, 4
      %s63 = int_to_ptr.vmem [resolvable:$true] %s62
      %65 = dma.vmem_to_smem %s63, 16, [#allocation9], [#allocation5]
    $region29: #{tpu_custom_call.1} parent=1 // pred_fallthru
      _
    // Predicated region
    $region30: #{tpu_custom_call.1} parent=1 // pred_check
      _
    $region31: #{tpu_custom_call.1} parent=1 // pred_check_branch
      %67 = sbr.rel (0) target = $region33
    $region32: #{tpu_custom_call.1} parent=1 // pred_region
      %68 = dma.done [#allocation3], 64
    $region33: #{tpu_custom_call.1} parent=1 // pred_fallthru
      _
    // Predicated region
    $region34: #{tpu_custom_call.1} parent=1 // pred_check
      _
    $region35: #{tpu_custom_call.1} parent=1 // pred_check_branch
      %70 = sbr.rel (0) target = $region37
    $region36: #{tpu_custom_call.1} parent=1 // pred_region
      %71 = dma.done [#allocation7], 256
    $region37: #{tpu_custom_call.1} parent=1 // pred_fallthru
      _
    // Predicated region
    $region38: #{tpu_custom_call.1} parent=1 // pred_check
      _
    $region39: #{tpu_custom_call.1} parent=1 // pred_check_branch
      %73 = sbr.rel (0) target = $region41
    $region40: #{tpu_custom_call.1} parent=1 // pred_region
      %74 = dma.done [#allocation7], 256
    $region41: #{tpu_custom_call.1} parent=1 // pred_fallthru
      _
    // Predicated region
    $region42: #{tpu_custom_call.1} parent=1 // pred_check
      _
    $region43: #{tpu_custom_call.1} parent=1 // pred_check_branch
      %76 = sbr.rel (0) target = $region45
    $region44: #{tpu_custom_call.1} parent=1 // pred_region
      %77 = dma.done [#allocation5], 16
    $region45: #{tpu_custom_call.1} parent=1 // pred_fallthru
      _
    %78 = sfence
    %s79 = sld [smem:[#allocation9]]
    %s80 = sld [smem:[#allocation9 + $0x1]]
    %s81 = sld [smem:[#allocation9 + $0x2]]
    %v82 = vld [vmem:[#allocation2] sm:$0xf]
    %v83 = vld [vmem:[%s1] sm:$0xf]
    %vm84 = vcmp.eq.f32.partialorder %v83, 0.0
    %vm85 = vcmp.eq.f32.partialorder %v83, 1.0
    %v86 = vsub.f32 1.0, %v82
    %v87 = vsel %vm84, %v86, 1.0
    %v88 = vsel %vm85, %v82, %v87
    %v89 = vlog2.pop %v88
    %v90 = vmul.f32 %v89, 0.6931472
    %v91 = vmax.f32 %v90, -100.0
    %v92 = vsel %vm85, 1, 0
    %v93 = vcvt.s32.f32 %v92
    %v94 = vsel %vm84, 1, 0
    %v95 = vcvt.s32.f32 %v94
    %v96 = vstv %s79
    %v97 = vmul.f32 %v96, %v95
    %v98 = vadd.f32 %v93, %v97
    %v99 = vmul.f32 %v91, %v98
    %v102 = vunpack.c.l.s4 1983009808
    %v103 = vunpack.c.0.s8 %v102
    %v104 = vlaneseq
    %v105 = vshrl.u32 %v104, 7
    %v106 = vsub.s32 %v103, %v105
    %v107 = vrot.slane %v99, %v106
    %v108 = vcombine.high %v107, %v107
    %vm111 = vcmask 1041408
    %v112 = vsel %vm111, %v107, 0.0
    %v113 = vsel %vm111, %v108, 0.0
    %v114 = vadd.f32 %v112, %v113
    %115 = vadd.xlane.f32.xlu0 %v114
    %v116 = vpop.xlane.xlu0 %115
    %v117 = vrot.slane %v116, 4
    %v118 = vadd.f32 %v116, %v117
    %v119 = vrot.slane %v118, 2
    %v120 = vadd.f32 %v118, %v119
    %v121 = vrot.slane %v120, 1
    %v122 = vadd.f32 %v120, %v121
    %s123 = vtos %v122
    %s124 = ssub.f32 0.0, %s123
    %v125 = vld [vmem:[#allocation6] sm:$0xff]
    %v126 = vld [vmem:[#allocation6 + $0x8] sm:$0xff]
    %v127 = vld [vmem:[#allocation8] sm:$0xff]
    %v128 = vld [vmem:[#allocation8 + $0x8] sm:$0xff]
    %v129 = vsub.f32 %v125, %v127
    %v130 = vsub.f32 %v126, %v128
    %v131 = vmul.f32 %v129, %v129
    %v132 = vmul.f32 %v130, %v130
    %v135 = vcombine.high %v131, %v131
    %v136 = vcombine.high %v132, %v132
    %vm139 = vcmask 1043456
    %v140 = vsel %vm139, %v131, 0.0
    %v141 = vrot.slane %v140, 4
    %v142 = vadd.f32 %v140, %v141
    %v143 = vrot.slane %v142, 2
    %v144 = vadd.f32 %v142, %v143
    %v145 = vrot.slane %v144, 1
    %v146 = vadd.f32 %v144, %v145
    %v147 = vsel %vm139, %v135, 0.0
    %v148 = vrot.slane %v147, 4
    %v149 = vadd.f32 %v147, %v148
    %v150 = vrot.slane %v149, 2
    %v151 = vadd.f32 %v149, %v150
    %v152 = vrot.slane %v151, 1
    %v153 = vadd.f32 %v151, %v152
    %v154 = vsel %vm139, %v132, 0.0
    %v155 = vrot.slane %v154, 4
    %v156 = vadd.f32 %v154, %v155
    %v157 = vrot.slane %v156, 2
    %v158 = vadd.f32 %v156, %v157
    %v159 = vrot.slane %v158, 1
    %v160 = vadd.f32 %v158, %v159
    %v161 = vsel %vm139, %v136, 0.0
    %v162 = vrot.slane %v161, 4
    %v163 = vadd.f32 %v161, %v162
    %v164 = vrot.slane %v163, 2
    %v165 = vadd.f32 %v163, %v164
    %v166 = vrot.slane %v165, 1
    %v167 = vadd.f32 %v165, %v166
    %v172 = vcombine.low %v146, %v153
    %v174 = vunpack.c.l.s4 1983009808
    %v175 = vunpack.c.0.s8 %v174
    %v176 = vlaneseq
    %v177 = vshrl.u32 %v176, 7
    %v178 = vsub.s32 %v175, %v177
    %v179 = vrot.slane %v172, %v178
    %v180 = vcombine.low %v160, %v167
    %v182 = vunpack.c.l.s4 1983009808
    %v183 = vunpack.c.0.s8 %v182
    %v184 = vlaneseq
    %v185 = vshrl.u32 %v184, 7
    %v186 = vsub.s32 %v183, %v185
    %v187 = vrot.slane %v180, %v186
    %vm188 = vcmask 1044484
    %v189 = vsel %vm188, %v179, %v179
    %vm190 = vcmask 1046534
    %v191 = vsel %vm190, %v179, %v189
    %v192 = vrot.slane %v187, 7
    %vm193 = vcmask 1041409
    %v194 = vsel %vm193, %v192, %v191
    %vm195 = vcmask 1043459
    %v196 = vsel %vm195, %v192, %v194
    %vm197 = vcmask 1045509
    %v198 = vsel %vm197, %v192, %v196
    %vm199 = vcmask 1047559
    %v200 = vsel %vm199, %v192, %v198
    %v202 = vsel %vm85, %v200, 0.0
    %v205 = vunpack.c.l.s4 1983009808
    %v206 = vunpack.c.0.s8 %v205
    %v207 = vlaneseq
    %v208 = vshrl.u32 %v207, 7
    %v209 = vsub.s32 %v206, %v208
    %v210 = vrot.slane %v202, %v209
    %v211 = vcombine.high %v210, %v210
    %v214 = vsel %vm111, %v210, 0.0
    %v215 = vsel %vm111, %v211, 0.0
    %v216 = vadd.f32 %v214, %v215
    %217 = vadd.xlane.f32.xlu0 %v216
    %v218 = vpop.xlane.xlu0 %217
    %v219 = vrot.slane %v218, 4
    %v220 = vadd.f32 %v218, %v219
    %v221 = vrot.slane %v220, 2
    %v222 = vadd.f32 %v220, %v221
    %v223 = vrot.slane %v222, 1
    %v224 = vadd.f32 %v222, %v223
    %s225 = vtos %v224
    %s226 = smul.f32 %s80, %s225
    %s227 = sadd.f32 %s124, %s226
    %v228 = vstv %s227
    %vm229 = vcmask 0
    %230 = vst.msk [vmem:[#allocation10] sm:$0x1] %vm229, %v228
    %p231 = scmp.eq.s32.totalorder 0, 0
    // Predicated region
    $region46: #{tpu_custom_call.1} parent=1 // pred_check
      %p232 = pneg %p231
    $region47: #{tpu_custom_call.1} parent=1 // pred_check_branch
      %234 = sbr.rel (%p232) target = $region49
    $region48: #{tpu_custom_call.1} parent=1 // pred_region
      %v235 = vld [vmem:[%s4] sm:$0x3]
      %v236 = vld [vmem:[%s5] sm:$0x3]
      %vm237 = vcmask 25600
      %v238 = vsel %vm237, %v235, -inf
      %239 = vmax.xlane.f32.xlu0 %v238
      %v240 = vpop.xlane.xlu0 %239
      %v241 = vsub.f32 %v235, %v240
      %v242 = vmul.f32 %v241, 1.442695
      %v243 = vpow.pop %v242
      %v244 = vsel %vm237, %v243, 0.0
      %245 = vadd.xlane.f32.xlu0 %v244
      %v246 = vpop.xlane.xlu0 %245
      %v247 = vlog2.pop %v246
      %v248 = vmul.f32 %v247, 0.6931472
      %v249 = vadd.f32 %v240, %v248
      %v250 = vlaneseq
      %v251 = vand.u32 %v250, 127
      %252 = vset.pattern.permute.xlu0 0
      %253 = vperm.xlu0 %252, %v236
      %v254 = vpop.permute.xlu0 %253
      %vm255 = vcmp.eq.s32.totalorder %v251, %v254
      %v256 = vsel %vm255, %v235, 0.0
      %v257 = vsel %vm237, %v256, 0.0
      %258 = vadd.xlane.f32.xlu0 %v257
      %v259 = vpop.xlane.xlu0 %258
      %v260 = vsub.f32 %v249, %v259
      %vm261 = vcmask 1024
      %v262 = vsel %vm261, %v260, 0.0
      %263 = vadd.xlane.f32.xlu0 %v262
      %v264 = vpop.xlane.xlu0 %263
      %v265 = vrot.slane %v264, 4
      %v266 = vadd.f32 %v264, %v265
      %v267 = vrot.slane %v266, 2
      %v268 = vadd.f32 %v266, %v267
      %v269 = vrot.slane %v268, 1
      %v270 = vadd.f32 %v268, %v269
      %s271 = vtos %v270
      %v272 = vld [vmem:[#allocation10] sm:$0x1]
      %s273 = smul.f32 %s81, %s271
      %v274 = vstv %s273
      %v275 = vadd.f32 %v272, %v274
      %276 = vst.msk [vmem:[#allocation10] sm:$0x1] %vm229, %v275
    $region49: #{tpu_custom_call.1} parent=1 // pred_fallthru
      _
    // Predicated region
    $region50: #{tpu_custom_call.1} parent=1 // pred_check
      _
    $region51: #{tpu_custom_call.1} parent=1 // pred_check_branch
      %278 = sbr.rel (0) target = $region53
    $region52: #{tpu_custom_call.1} parent=1 // pred_region
      %s280 = ssub.s32 16, 16
      %281 = vsyncadd [#allocation4], %s280
      %s283 = sshll.u32 [#allocation10], 4
      %s284 = int_to_ptr.vmem [resolvable:$true] %s283
      %286 = dma.vmem_to_hbm [thread:$0]  %s284, 16, %s7, [#allocation4]
    $region53: #{tpu_custom_call.1} parent=1 // pred_fallthru
      _
    // Predicated region
    $region54: #{tpu_custom_call.1} parent=1 // pred_check
      _
    $region55: #{tpu_custom_call.1} parent=1 // pred_check_branch
      %288 = sbr.rel (0) target = $region57
    $region56: #{tpu_custom_call.1} parent=1 // pred_region
      %289 = dma.done [#allocation4], 16
    $region57: #{tpu_custom_call.1} parent=1 // pred_fallthru
      _
    %290 = vsyncpa [#allocation3], 1
    %291 = vsyncpa [#allocation7], 1
    %292 = vsyncpa [#allocation4], 1
    %293 = vsyncpa [#allocation5], 1

</llo_original>
